<compile_context>
chip_gen: v7x
topology: tpu7x:2x2x1
jax: 0.10.0
libtpu: 0.0.40
codegen_flags: <defaults>
</compile_context>

<pallas_src>
import jax
import jax.numpy as jnp
from jax.experimental import pallas as pl
from jax.experimental.pallas import tpu as pltpu


def _pointer_net_loss_kernel(lengths_ref, target_ref, logits_ref, out_ref):
    # lengths_ref: (B,)            int32, SMEM (scalar prefetch)
    # target_ref : (1, T_TILE, 1)  int32, VMEM block
    # logits_ref : (1, T_TILE, S)  native dtype, VMEM block
    # out_ref    : (1, T_TILE, 1)  float32, VMEM block (per-row masked -log p)
    b = pl.program_id(0)
    tt = pl.program_id(1)
    t_tile = logits_ref.shape[1]
    s = logits_ref.shape[2]

    # Upcast per-tile inside the kernel (keeps HBM traffic at native width).
    p = logits_ref[0].astype(jnp.float32)        # (T_TILE, S)
    tgt = target_ref[0]                          # (T_TILE, 1) int32

    # Gather-before-log: pick the target probability per row via select +
    # lane reduction (equivalent to torch.gather on dim=-1).
    col = jax.lax.broadcasted_iota(jnp.int32, (t_tile, s), 1)
    gathered = jnp.sum(jnp.where(col == tgt, p, 0.0), axis=1, keepdims=True)  # (T_TILE, 1)

    # sequence_mask: global t index < lengths[b].  Also zeroes rows that fall
    # in a padded partial tile (t >= T implies t >= lengths[b]).
    t_global = tt * t_tile + jax.lax.broadcasted_iota(jnp.int32, (t_tile, 1), 0)
    valid = t_global < lengths_ref[b]            # (T_TILE, 1) bool

    # Select (not multiply) so -inf / garbage on masked rows never becomes NaN.
    out_ref[0] = jnp.where(valid, -jnp.log(gathered), 0.0)


def pointer_net_loss(target, logits, lengths, *, t_tile=None):
    """target: (B, T) int, logits: (B, T, S) float, lengths: (B,) int -> scalar f32."""
    B, T = target.shape
    S = logits.shape[-1]

    if t_tile is None:
        # Aim for ~2 MiB logits blocks (double-buffered -> well under the 32 MiB
        # scoped VMEM default and v7x's 64 MiB physical VMEM).
        bytes_per_row = S * jnp.dtype(logits.dtype).itemsize
        rows = max(8, min(T, (2 << 20) // max(bytes_per_row, 1)))
        t_tile = T if rows >= T else max(8, (rows // 8) * 8)
    num_tt = pl.cdiv(T, t_tile)

    target_3d = target.astype(jnp.int32).reshape(B, T, 1)   # free reshape/cast glue
    lengths_i32 = lengths.astype(jnp.int32).reshape(B)

    # TODO(synk): for very small S (e.g. 16) the lane dim is under-utilized; a
    # lane-dense (B, T*S) flat-gather layout would recover full vreg width.
    per_row_loss = pl.pallas_call(
        _pointer_net_loss_kernel,
        out_shape=jax.ShapeDtypeStruct((B, T, 1), jnp.float32),
        grid_spec=pltpu.PrefetchScalarGridSpec(
            num_scalar_prefetch=1,                       # lengths -> SMEM
            grid=(B, num_tt),
            in_specs=[
                pl.BlockSpec((1, t_tile, 1), lambda b, tt, lens: (b, tt, 0)),  # target
                pl.BlockSpec((1, t_tile, S), lambda b, tt, lens: (b, tt, 0)),  # logits
            ],
            out_specs=pl.BlockSpec((1, t_tile, 1), lambda b, tt, lens: (b, tt, 0)),
        ),
        compiler_params=pltpu.CompilerParams(
            dimension_semantics=("parallel", "parallel"),
            vmem_limit_bytes=32 * 1024 * 1024,
        ),
    )(lengths_i32, target_3d, logits)

    # Tiny epilogue: one reduction over (B, T) and a single divide.
    total = jnp.sum(per_row_loss)
    denom = jnp.sum(lengths.astype(jnp.float32))
    return total / denom


def _reference_loss(target, logits, lengths):
    # Pure-JAX reference mirroring the PyTorch forward.
    B, T = target.shape
    log_p = jnp.log(logits.astype(jnp.float32))
    gathered = jnp.take_along_axis(log_p, target[..., None].astype(jnp.int32), axis=-1)
    losses = -gathered[..., 0]                                    # (B, T)
    mask = (jnp.arange(T)[None, :] < lengths[:, None]).astype(jnp.float32)
    return jnp.sum(losses * mask) / jnp.sum(lengths.astype(jnp.float32))


if __name__ == "__main__":
    key = jax.random.PRNGKey(0)
    B, T, S = 2, 8, 16

    k1, k2 = jax.random.split(key)
    # Pointer-net "logits" are probabilities (post-softmax attention weights).
    raw = jax.random.normal(k1, (B, T, S), dtype=jnp.float32)
    logits = jax.nn.softmax(raw, axis=-1)
    target = jax.random.randint(k2, (B, T), 0, S, dtype=jnp.int32)
    lengths = jnp.array([T, 5], dtype=jnp.int32)

    loss = pointer_net_loss(target, logits, lengths)
    jax.block_until_ready(loss)

    ref = _reference_loss(target, logits, lengths)
    assert jnp.allclose(loss, ref, rtol=1e-5, atol=1e-5), (loss, ref)

    print("KERNEL_OK")
</pallas_src>

<mosaic_0001>
module attributes {stable_mosaic.version = 11 : i64} {
  func.func @_pointer_net_loss_kernel(%arg0: i32, %arg1: i32, %arg2: memref<2xi32, #tpu.memory_space<smem>>, %arg3: memref<1x8x1xi32, #tpu.memory_space<vmem>>, %arg4: memref<1x8x16xf32, #tpu.memory_space<vmem>>, %arg5: memref<1x8x1xf32, #tpu.memory_space<vmem>>) attributes {dimension_semantics = [#tpu.dimension_semantics<parallel>, #tpu.dimension_semantics<parallel>], iteration_bounds = array<i64: 2, 1>, scalar_prefetch = 1 : i64, scratch_operands = 0 : i64, tpu.core_type = #tpu.core_type<tc>, window_params = [{transform_indices = @transform_0, window_bounds = array<i64: 1, 8, 1>}, {transform_indices = @transform_1, window_bounds = array<i64: 1, 8, 16>}, {transform_indices = @transform_2, window_bounds = array<i64: 1, 8, 1>}]} {
    %c0 = arith.constant 0 : index
    %c0_0 = arith.constant 0 : index
    %c0_1 = arith.constant 0 : index
    %0 = vector.load %arg4[%c0, %c0_0, %c0_1] : memref<1x8x16xf32, #tpu.memory_space<vmem>>, vector<1x8x16xf32>
    %1 = vector.shape_cast %0 : vector<1x8x16xf32> to vector<8x16xf32>
    %c0_2 = arith.constant 0 : index
    %c0_3 = arith.constant 0 : index
    %c0_4 = arith.constant 0 : index
    %2 = vector.load %arg3[%c0_2, %c0_3, %c0_4] : memref<1x8x1xi32, #tpu.memory_space<vmem>>, vector<1x8x1xi32>
    %3 = vector.shape_cast %2 : vector<1x8x1xi32> to vector<8x1xi32>
    %4 = tpu.iota {dimensions = array<i32: 1>} : vector<8x16xi32>
    %5 = vector.broadcast %3 : vector<8x1xi32> to vector<8x16xi32>
    %6 = arith.cmpi eq, %4, %5 : vector<8x16xi32>
    %cst = arith.constant 0.000000e+00 : f32
    %7 = vector.broadcast %cst : f32 to vector<8x16xf32>
    %8 = arith.select %6, %1, %7 : vector<8x16xi1>, vector<8x16xf32>
    %cst_5 = arith.constant dense<0.000000e+00> : vector<8xf32>
    %9 = vector.multi_reduction <add>, %8, %cst_5 [1] : vector<8x16xf32> to vector<8xf32>
    %10 = vector.shape_cast %9 : vector<8xf32> to vector<8x1xf32>
    %c8_i32 = arith.constant 8 : i32
    %11 = arith.muli %arg1, %c8_i32 : i32
    %12 = tpu.iota {dimensions = array<i32: 0>} : vector<8x1xi32>
    %13 = vector.broadcast %11 : i32 to vector<8x1xi32>
    %14 = arith.addi %13, %12 : vector<8x1xi32>
    %15 = arith.index_cast %arg0 : i32 to index
    %16 = memref.load %arg2[%15] : memref<2xi32, #tpu.memory_space<smem>>
    %17 = vector.broadcast %16 : i32 to vector<8x1xi32>
    %18 = arith.cmpi slt, %14, %17 : vector<8x1xi32>
    %19 = math.log %10 : vector<8x1xf32>
    %cst_6 = arith.constant 0.000000e+00 : f32
    %20 = vector.broadcast %cst_6 : f32 to vector<8x1xf32>
    %21 = arith.subf %20, %19 : vector<8x1xf32>
    %cst_7 = arith.constant 0.000000e+00 : f32
    %22 = vector.broadcast %cst_7 : f32 to vector<8x1xf32>
    %23 = arith.select %18, %21, %22 : vector<8x1xi1>, vector<8x1xf32>
    %c0_8 = arith.constant 0 : index
    %c0_9 = arith.constant 0 : index
    %c0_10 = arith.constant 0 : index
    %24 = vector.load %arg5[%c0_8, %c0_9, %c0_10] : memref<1x8x1xf32, #tpu.memory_space<vmem>>, vector<1x8x1xf32>
    %25 = vector.shape_cast %24 : vector<1x8x1xf32> to vector<8x1xf32>
    %26 = vector.shape_cast %23 : vector<8x1xf32> to vector<1x8x1xf32>
    tpu.vector_store %arg5[%c0_8, %c0_9, %c0_10], %26 {strides = array<i32>} : memref<1x8x1xf32, #tpu.memory_space<vmem>>, vector<1x8x1xf32>,
    return
  }
  func.func @transform_0(%arg0: i32, %arg1: i32, %arg2: memref<2xi32, #tpu.memory_space<smem>>) -> (i32, i32, i32) {
    %c0_i32 = arith.constant 0 : i32
    %c0_i32_0 = arith.constant 0 : i32
    return %arg0, %arg1, %c0_i32 : i32, i32, i32
  }
  func.func @transform_1(%arg0: i32, %arg1: i32, %arg2: memref<2xi32, #tpu.memory_space<smem>>) -> (i32, i32, i32) {
    %c0_i32 = arith.constant 0 : i32
    %c0_i32_0 = arith.constant 0 : i32
    return %arg0, %arg1, %c0_i32 : i32, i32, i32
  }
  func.func @transform_2(%arg0: i32, %arg1: i32, %arg2: memref<2xi32, #tpu.memory_space<smem>>) -> (i32, i32, i32) {
    %c0_i32 = arith.constant 0 : i32
    %c0_i32_0 = arith.constant 0 : i32
    return %arg0, %arg1, %c0_i32 : i32, i32, i32
  }
}

</mosaic_0001>

<llo_original>
// kernel: tpu_custom_call.1
$region0: #{tpu_custom_call.1}
  #allocation0 [shape = 'u32[]', space=smem, size = 0x4, offset = 0x4, fixed_abs, tag = 'smem constant byte address 0x4 - core index']
  #allocation1 [shape = 'u32[144,128]{1,0:T(1,128)}', space=vmem, size = 0x12000, scoped, tag = 'internal scratch']
  #allocation2 [shape = 's32[1]{0}', space=sflag, size = 0x4, scoped, tag = 'scoped memory for tpu_custom_call.1']
  #allocation3 [shape = 'u8[512]{0}', space=smem, size = 0x200, scoped, tag = 'prefetched SMEM operand 0']
  %s0 = inlined_call_operand.vmem [shape: s32[2], index: 0, kind: input, shape index: {}]
  %s1 = inlined_call_operand.vmem [shape: s32[2,8,1], index: 1, kind: input, shape index: {}]
  %s2 = inlined_call_operand.vmem [shape: f32[2,8,16], index: 2, kind: input, shape index: {}]
  %s3 = inlined_call_operand.vmem [shape: f32[2,8,1], index: 3, kind: output, shape index: {}]
  %s4 = sld [smem:[#allocation0]]
  $region41: #{tpu_custom_call.1} parent=0
    _
  %s6 = ssub.s32 1, %s4
  %s7 = scalar_select 0, %s6, %s4
  %s8 = sshll.u32 %s0, 4
  %s9 = int_to_ptr.vmem [resolvable:$true] %s8
  %11 = dma.vmem_to_smem %s9, 16, [#allocation3], [#allocation2]
  %12 = dma.done [#allocation2], 16
  %13 = sfence
  loop: start=0, step=1, limit=4
  $region2: #{tpu_custom_call.1} parent=0 // loop_pre_header
    _
  $region3: #{tpu_custom_call.1} parent=0 // loop_header
    %s15 = sphi 0, %s19
    %p16 = scmp.ge.s32.totalorder %s15, 4
    %s22 = sphi 0, %s34
    %s23 = sphi 0, %s30
    %s24 = sphi 0, %s22
    %s25 = sphi 0, %s23
    %s26 = sphi 0, %s24
    %s27 = sphi 0, %s25
    %s39 = sphi 0, %s41
    %s42 = sphi 0, %s39
    %s43 = sphi 0, %s42
    %s59 = sphi 0, %s43
    %s67 = sphi 0, %s69
    %s70 = sphi 0, %s67
    %s71 = sphi 0, %s70
    %s87 = sphi 0, %s71
    %s95 = sphi 0, %s97
    %s98 = sphi 0, %s95
    %s99 = sphi 0, %s98
    %s115 = sphi 0, %s99
  $region4: #{tpu_custom_call.1} parent=0 // loop_header_branch
    %18 = sbr.rel (%p16) target = $region8
  $region5: #{tpu_custom_call.1} parent=0 // loop_body
    %s20 = ssub.s32 %s15, 1
    %s21 = ssub.s32 %s15, 2
    %s28 = sadd.s32 1, %s23
    %p29 = scmp.ge.s32.totalorder %s28, 1
    %s30 = scalar_select %p29, 0, %s28
    %s31 = sadd.s32 1, %s22
    %s32 = scalar_select %p29, %s31, %s22
    %p33 = scmp.ge.s32.totalorder %s32, 2
    %s34 = scalar_select %p33, 0, %s32
    %s35 = ssub.s32 %s22, %s34
    %s36 = ssub.s32 %s23, %s30
    %s37 = sor.u32 %s35, %s36
    %p38 = scmp.eq.s32.totalorder %s37, 0
    %s40 = sadd.s32 %s39, 1
    %s41 = scalar_select %p38, %s39, %s40
    %p44 = pneg %p38
    %p45 = scmp.eq.s32.totalorder %s15, 1
    %p46 = por %p44, %p45
    %p47 = scmp.ne.s32.totalorder %s39, %s42
    %p48 = scmp.eq.s32.totalorder %s15, 0
    %p49 = por %p47, %p48
    %p50 = scmp.ne.s32.totalorder %s39, %s42
    %p51 = scmp.eq.s32.totalorder %s20, 1
    %p52 = por %p50, %p51
    %p53 = scmp.ne.s32.totalorder %s42, %s43
    %p54 = scmp.eq.s32.totalorder %s20, 0
    %p55 = por %p53, %p54
    %p56 = scmp.ne.s32.totalorder %s42, %s43
    %p57 = scmp.eq.s32.totalorder %s21, 1
    %p58 = por %p56, %p57
    %p60 = scmp.ne.s32.totalorder %s43, %s59
    %p61 = scmp.eq.s32.totalorder %s21, 0
    %p62 = por %p60, %p61
    %s63 = ssub.s32 %s22, %s34
    %s64 = ssub.s32 %s23, %s30
    %s65 = sor.u32 %s63, %s64
    %p66 = scmp.eq.s32.totalorder %s65, 0
    %s68 = sadd.s32 %s67, 1
    %s69 = scalar_select %p66, %s67, %s68
    %p72 = pneg %p66
    %p73 = scmp.eq.s32.totalorder %s15, 1
    %p74 = por %p72, %p73
    %p75 = scmp.ne.s32.totalorder %s67, %s70
    %p76 = scmp.eq.s32.totalorder %s15, 0
    %p77 = por %p75, %p76
    %p78 = scmp.ne.s32.totalorder %s67, %s70
    %p79 = scmp.eq.s32.totalorder %s20, 1
    %p80 = por %p78, %p79
    %p81 = scmp.ne.s32.totalorder %s70, %s71
    %p82 = scmp.eq.s32.totalorder %s20, 0
    %p83 = por %p81, %p82
    %p84 = scmp.ne.s32.totalorder %s70, %s71
    %p85 = scmp.eq.s32.totalorder %s21, 1
    %p86 = por %p84, %p85
    %p88 = scmp.ne.s32.totalorder %s71, %s87
    %p89 = scmp.eq.s32.totalorder %s21, 0
    %p90 = por %p88, %p89
    %s91 = ssub.s32 %s22, %s34
    %s92 = ssub.s32 %s23, %s30
    %s93 = sor.u32 %s91, %s92
    %p94 = scmp.eq.s32.totalorder %s93, 0
    %s96 = sadd.s32 %s95, 1
    %s97 = scalar_select %p94, %s95, %s96
    %p100 = pneg %p94
    %p101 = scmp.eq.s32.totalorder %s15, 1
    %p102 = por %p100, %p101
    %p103 = scmp.ne.s32.totalorder %s95, %s98
    %p104 = scmp.eq.s32.totalorder %s15, 0
    %p105 = por %p103, %p104
    %p106 = scmp.ne.s32.totalorder %s95, %s98
    %p107 = scmp.eq.s32.totalorder %s20, 1
    %p108 = por %p106, %p107
    %p109 = scmp.ne.s32.totalorder %s98, %s99
    %p110 = scmp.eq.s32.totalorder %s20, 0
    %p111 = por %p109, %p110
    %p112 = scmp.ne.s32.totalorder %s98, %s99
    %p113 = scmp.eq.s32.totalorder %s21, 1
    %p114 = por %p112, %p113
    %p116 = scmp.ne.s32.totalorder %s99, %s115
    %p117 = scmp.eq.s32.totalorder %s21, 0
    %p118 = por %p116, %p117
    %p119 = scmp.le.s32.totalorder 1, %s15
    %p120 = scmp.lt.s32.totalorder %s15, 3
    %p121 = pnand %p119, %p120
    %p122 = pneg %p121
    // Predicated region
    $region9: #{tpu_custom_call.1} parent=5 // pred_check
      _
    $region10: #{tpu_custom_call.1} parent=5 // pred_check_branch
      %124 = sbr.rel (%p121) target = $region12
    $region11: #{tpu_custom_call.1} parent=5 // pred_region
      %s125 = ssub.s32 %s15, 1
    $region12: #{tpu_custom_call.1} parent=5 // pred_fallthru
      _
    %p126 = scmp.lt.s32.totalorder %s15, 2
    // Predicated region
    $region13: #{tpu_custom_call.1} parent=5 // pred_check
      %p127 = pneg %p126
    $region14: #{tpu_custom_call.1} parent=5 // pred_check_branch
      %129 = sbr.rel (%p127) target = $region16
    $region15: #{tpu_custom_call.1} parent=5 // pred_region
      // Predicated region
      $region17: #{tpu_custom_call.1} parent=15 // pred_check
        %p130 = pneg %p49
      $region18: #{tpu_custom_call.1} parent=15 // pred_check_branch
        %132 = sbr.rel (%p130) target = $region20
      $region19: #{tpu_custom_call.1} parent=15 // pred_region
        %p133 = scmp.lt.s32.totalorder %s22, 1
        %s134 = scalar_select %p133, %s22, 1
        %p135 = scmp.lt.s32.totalorder %s23, 0
        %s136 = scalar_select %p135, %s23, 0
        %s137 = sadd.s32 %s136, %s134
        %s138 = smul.addr %s137, 8
        %s139 = scalar_lea.vmem %s1, %s138
      $region20: #{tpu_custom_call.1} parent=15 // pred_fallthru
        _
      // Predicated region
      $region21: #{tpu_custom_call.1} parent=15 // pred_check
        %p140 = pneg %p77
      $region22: #{tpu_custom_call.1} parent=15 // pred_check_branch
        %142 = sbr.rel (%p140) target = $region24
      $region23: #{tpu_custom_call.1} parent=15 // pred_region
        %p143 = scmp.lt.s32.totalorder %s22, 1
        %s144 = scalar_select %p143, %s22, 1
        %p145 = scmp.lt.s32.totalorder %s23, 0
        %s146 = scalar_select %p145, %s23, 0
        %s147 = sadd.s32 %s146, %s144
        %s148 = smul.addr %s147, 8
        %s149 = scalar_lea.vmem %s2, %s148
      $region24: #{tpu_custom_call.1} parent=15 // pred_fallthru
        _
    $region16: #{tpu_custom_call.1} parent=5 // pred_fallthru
      _
    %p150 = scmp.le.s32.totalorder 1, %s15
    %p151 = scmp.lt.s32.totalorder %s15, 3
    %p152 = pnand %p150, %p151
    %p153 = pneg %p152
    // Predicated region
    $region25: #{tpu_custom_call.1} parent=5 // pred_check
      _
    $region26: #{tpu_custom_call.1} parent=5 // pred_check_branch
      %155 = sbr.rel (%p152) target = $region28
    $region27: #{tpu_custom_call.1} parent=5 // pred_region
      %s156 = ssub.s32 %s15, 1
      %p157 = scmp.lt.s32.totalorder %s24, 1
      %s158 = scalar_select %p157, %s24, 1
      %p159 = scmp.lt.s32.totalorder %s25, 0
      %s160 = scalar_select %p159, %s25, 0
      %s161 = sadd.s32 %s160, %s158
      %s162 = smul.addr %s161, 8
      %s163 = scalar_lea.vmem %s1, %s162
      %p164 = pneg %p55
      %p165 = pneg %p52
      %p166 = scmp.lt.s32.totalorder %s24, 1
      %s167 = scalar_select %p166, %s24, 1
      %p168 = scmp.lt.s32.totalorder %s25, 0
      %s169 = scalar_select %p168, %s25, 0
      %s170 = sadd.s32 %s169, %s167
      %s171 = smul.addr %s170, 8
      %s172 = scalar_lea.vmem %s2, %s171
      %p173 = pneg %p83
      %p174 = pneg %p80
      %p175 = pneg %p111
      %p176 = pneg %p108
      %p177 = scmp.lt.s32.totalorder %s24, 1
      %s178 = scalar_select %p177, %s24, 1
      %p179 = scmp.lt.s32.totalorder %s25, 0
      %s180 = scalar_select %p179, %s25, 0
      %s181 = sadd.s32 %s180, %s178
      %s182 = smul.addr %s181, 8
      %s183 = scalar_lea.vmem %s3, %s182
      %p184 = scmp.lt.s32.totalorder %s24, 1
      %s185 = scalar_select %p184, %s24, 1
      %p186 = scmp.lt.s32.totalorder %s25, 0
      %s187 = scalar_select %p186, %s25, 0
      %s188 = sadd.s32 %s187, %s185
      %s189 = smul.addr %s188, 8
      %s190 = scalar_lea.vmem %s1, %s189
      %p191 = scmp.lt.s32.totalorder %s24, 1
      %s192 = scalar_select %p191, %s24, 1
      %p193 = scmp.lt.s32.totalorder %s25, 0
      %s194 = scalar_select %p193, %s25, 0
      %s195 = sadd.s32 %s194, %s192
      %s196 = smul.addr %s195, 8
      %s197 = scalar_lea.vmem %s2, %s196
      %p198 = scmp.lt.s32.totalorder %s24, 1
      %s199 = scalar_select %p198, %s24, 1
      %p200 = scmp.lt.s32.totalorder %s25, 0
      %s201 = scalar_select %p200, %s25, 0
      %s202 = sadd.s32 %s201, %s199
      %s203 = smul.addr %s202, 8
      %s204 = scalar_lea.vmem %s3, %s203
      %v205 = vld [vmem:[%s197] sm:$0xff]
      %v206 = vld [vmem:[%s190] sm:$0xff]
      %v207 = vlaneseq
      %v208 = vand.u32 %v207, 127
      %209 = vset.pattern.permute.xlu0 0
      %210 = vperm.xlu0 %209, %v206
      %v211 = vpop.permute.xlu0 %210
      %vm212 = vcmp.eq.s32.totalorder %v208, %v211
      %v213 = vsel %vm212, %v205, 0.0
      %vm214 = vcmask 130048
      %v215 = vsel %vm214, %v213, 0.0
      %216 = vadd.xlane.f32.xlu0 %v215
      %v217 = vpop.xlane.xlu0 %216
      %s218 = smul.u32 %s25, 8
      %v219 = vlaneseq
      %v220 = vshrl.u32 %v219, 7
      %v221 = vstv %s218
      %v222 = vadd.s32 %v221, %v220
      %s223 = sld [smem:[#allocation3 + %s24]]
      %v224 = vstv %s223
      %vm225 = vcmp.lt.s32.totalorder %v222, %v224
      %v226 = vlog2.pop %v217
      %v227 = vmul.f32 %v226, 0.6931472
      %v228 = vsub.f32 0.0, %v227
      %v229 = vsel %vm225, %v228, 0.0
      %vm230 = vcmask 7168
      %231 = vst.msk [vmem:[%s204] sm:$0xff] %vm230, %v229
      %p232 = scmp.lt.s32.totalorder %s24, 1
      %s233 = scalar_select %p232, %s24, 1
      %p234 = scmp.lt.s32.totalorder %s25, 0
      %s235 = scalar_select %p234, %s25, 0
      %s236 = sadd.s32 %s235, %s233
      %s237 = smul.addr %s236, 8
      %s238 = scalar_lea.vmem %s3, %s237
      // Predicated region
      $region29: #{tpu_custom_call.1} parent=27 // pred_check
        %p239 = pneg %p108
      $region30: #{tpu_custom_call.1} parent=27 // pred_check_branch
        %241 = sbr.rel (%p239) target = $region32
      $region31: #{tpu_custom_call.1} parent=27 // pred_region
        _
      $region32: #{tpu_custom_call.1} parent=27 // pred_fallthru
        _
    $region28: #{tpu_custom_call.1} parent=5 // pred_fallthru
      _
    %p242 = scmp.le.s32.totalorder 2, %s15
    // Predicated region
    $region33: #{tpu_custom_call.1} parent=5 // pred_check
      %p243 = pneg %p242
    $region34: #{tpu_custom_call.1} parent=5 // pred_check_branch
      %245 = sbr.rel (%p243) target = $region36
    $region35: #{tpu_custom_call.1} parent=5 // pred_region
      %s246 = ssub.s32 %s15, 2
      // Predicated region
      $region37: #{tpu_custom_call.1} parent=35 // pred_check
        %p247 = pneg %p114
      $region38: #{tpu_custom_call.1} parent=35 // pred_check_branch
        %249 = sbr.rel (%p247) target = $region40
      $region39: #{tpu_custom_call.1} parent=35 // pred_region
        %p250 = scmp.lt.s32.totalorder %s26, 1
        %s251 = scalar_select %p250, %s26, 1
        %p252 = scmp.lt.s32.totalorder %s27, 0
        %s253 = scalar_select %p252, %s27, 0
        %s254 = sadd.s32 %s253, %s251
        %s255 = smul.addr %s254, 8
        %s256 = scalar_lea.vmem %s3, %s255
      $region40: #{tpu_custom_call.1} parent=35 // pred_fallthru
        _
    $region36: #{tpu_custom_call.1} parent=5 // pred_fallthru
      _
  $region6: #{tpu_custom_call.1} parent=0 // loop_footer
    %s19 = sadd.s32 1, %s15
  $region7: #{tpu_custom_call.1} parent=0 // loop_footer_branch
    %14 = sbr.rel target = $region3
  $region8: #{tpu_custom_call.1} parent=0 // loop_exit
    _

</llo_original>
